<compile_context>
chip_gen: v7x
topology: tpu7x:2x2x1
jax: 0.10.0
libtpu: 0.0.40
codegen_flags: <defaults>
</compile_context>

<pallas_src>
import functools

import jax
import jax.numpy as jnp
from jax import lax
from jax.experimental import pallas as pl
from jax.experimental.pallas import tpu as pltpu


def _aux_conv_kernel(x_ref, w1_ref, b1_ref, w2_ref, b2_ref, o_ref, *, H, W):
    # x_ref : (bb, Cin, H*W)   batch block, channels on sublanes, spatial on lanes
    # w1_ref: (3, Ct, Cin)     conv1 per-tap weights (taps along H)
    # b1_ref: (Ct, 1)
    # w2_ref: (3, Ct, Ct)      conv2 per-tap weights (taps along W)
    # b2_ref: (Ct, 1)
    # o_ref : (bb, Ct, Hout*Wout)  channel-major output (PyTorch NCHW-flatten order)
    bb = x_ref.shape[0]
    Hout, Wout = H - 2, W - 2
    M1 = Hout * W          # conv1 output width in flattened (h*W + w) coords
    M2 = M1 - 2            # conv2 computed width (cols with w >= Wout are junk)

    w1_taps = [w1_ref[k] for k in range(3)]   # each (Ct, Cin)
    w2_taps = [w2_ref[k] for k in range(3)]   # each (Ct, Ct)
    b1 = b1_ref[...]                          # (Ct, 1) broadcasts over lanes
    b2 = b2_ref[...]

    for b in range(bb):                       # static unroll over the batch block
        xb = x_ref[b]                         # (Cin, H*W), lane-dense

        # ---- Conv2d(kernel=(3,1)) over H: 3 accumulated tap matmuls ----
        # Tap k reads x[ci, h+k, w] == xb[ci, (h*W + w) + k*W]  (static lane slice).
        acc1 = jnp.dot(w1_taps[0], xb[:, 0:M1],
                       preferred_element_type=jnp.float32)
        for k in (1, 2):
            acc1 = acc1 + jnp.dot(w1_taps[k], xb[:, k * W:k * W + M1],
                                  preferred_element_type=jnp.float32)
        y1 = jnp.maximum(acc1 + b1, 0.0)      # (Ct, M1), all columns valid

        # ---- Conv2d(kernel=(1,3)) over W: 3 accumulated tap matmuls ----
        # Tap k reads y1[ci, h, w+k] == y1[ci, (h*W + w) + k]  (static lane slice).
        acc2 = jnp.dot(w2_taps[0], y1[:, 0:M2],
                       preferred_element_type=jnp.float32)
        for k in (1, 2):
            acc2 = acc2 + jnp.dot(w2_taps[k], y1[:, k:k + M2],
                                  preferred_element_type=jnp.float32)
        y2 = jnp.maximum(acc2 + b2, 0.0)      # (Ct, M2); cols with w >= Wout are junk

        # Compact stride-W rows to stride-Wout rows (drop the 2 invalid columns per
        # row) -> (Ct, Hout*Wout); this is exactly PyTorch's NCHW Flatten order.
        o_ref[b] = jnp.concatenate(
            [y2[:, h * W:h * W + Wout] for h in range(Hout)], axis=1)


def _round_up(v, m):
    return (v + m - 1) // m * m


def _tpu_vmem_and_cores():
    """(VMEM capacity bytes, TensorCores sharing the grid) with safe fallbacks."""
    vmem_cap, num_cores = 64 * 1024 * 1024, 1   # conservative: safe on every generation
    try:
        info = pltpu.get_tpu_info()
        vmem_cap = int(getattr(info, "vmem_capacity_bytes", vmem_cap)) or vmem_cap
        for attr in ("num_cores", "tensorcore_count", "num_tensorcores"):
            v = getattr(info, attr, None)
            if v:
                num_cores = int(v)
                break
    except Exception:
        pass
    return vmem_cap, num_cores


def _pick_batch_block(n, per_elem_bytes, vmem_budget, num_cores, max_unroll=16):
    """Largest divisor of n fitting the VMEM budget; keep grid >= num_cores steps."""
    cap = max(1, min(n, max_unroll, vmem_budget // max(per_elem_bytes, 1)))
    if num_cores > 1 and n >= num_cores:
        cap = min(cap, n // num_cores)
    for bb in range(cap, 0, -1):
        if n % bb == 0:
            return bb
    return 1


@jax.jit
def aux_conv_forward(x_nchw, w1, b1, w2, b2):
    """AuxConv forward.

    x_nchw: (N, Cin, H, W) f32
    w1: (Ct, Cin, 3, 1), b1: (Ct,)   -- PyTorch Conv2d layouts
    w2: (Ct, Ct, 1, 3),  b2: (Ct,)
    returns (N, Ct*(H-2)*(W-2)) f32, matching the PyTorch module.
    """
    N, Cin, H, W = x_nchw.shape
    Ct = w1.shape[0]
    Hout, Wout = H - 2, W - 2
    P = Hout * Wout
    HW = H * W

    # Free reshape of NCHW (no transpose, no extra HBM round trip).
    x_flat = x_nchw.reshape(N, Cin, HW).astype(jnp.float32)
    # Per-tap weight layout: w1_t[k][co, ci] = w1[co, ci, k, 0], etc.
    w1_t = jnp.transpose(w1[:, :, :, 0], (2, 0, 1)).astype(jnp.float32)   # (3, Ct, Cin)
    w2_t = jnp.transpose(w2[:, :, 0, :], (2, 0, 1)).astype(jnp.float32)   # (3, Ct, Ct)
    b1_c = b1.reshape(Ct, 1).astype(jnp.float32)
    b2_c = b2.reshape(Ct, 1).astype(jnp.float32)

    # VMEM- and core-count-aware batch block.
    vmem_cap, num_cores = _tpu_vmem_and_cores()
    in_elem = _round_up(Cin, 8) * _round_up(HW, 128) * 4
    out_elem = _round_up(Ct, 8) * _round_up(P, 128) * 4
    inter = 8 * _round_up(Ct, 8) * _round_up(HW, 128) * 4     # loose headroom per element
    per_elem = 2 * in_elem + 2 * out_elem + inter             # 2x = double-buffered blocks
    bb = _pick_batch_block(N, per_elem, int(vmem_cap * 0.5), num_cores)
    grid_n = N // bb
    vmem_limit = int(vmem_cap * 0.8)

    kernel = functools.partial(_aux_conv_kernel, H=H, W=W)

    out = pl.pallas_call(
        kernel,
        out_shape=jax.ShapeDtypeStruct((N, Ct, P), jnp.float32),
        grid=(grid_n,),
        in_specs=[
            pl.BlockSpec((bb, Cin, HW), lambda n: (n, 0, 0)),
            pl.BlockSpec((3, Ct, Cin), lambda n: (0, 0, 0)),
            pl.BlockSpec((Ct, 1), lambda n: (0, 0)),
            pl.BlockSpec((3, Ct, Ct), lambda n: (0, 0, 0)),
            pl.BlockSpec((Ct, 1), lambda n: (0, 0)),
        ],
        out_specs=pl.BlockSpec((bb, Ct, P), lambda n: (n, 0, 0)),
        compiler_params=pltpu.CompilerParams(
            dimension_semantics=("parallel",),
            vmem_limit_bytes=vmem_limit),
    )(x_flat, w1_t, b1_c, w2_t, b2_c)

    # PyTorch Flatten of the NCHW conv output == merge of the trailing dims.
    return out.reshape(N, Ct * P)


def _reference_forward(x_nchw, w1, b1, w2, b2):
    """Pure-JAX NCHW reference using lax.conv (mirrors the PyTorch module)."""
    Ct = w1.shape[0]
    dn = ("NCHW", "OIHW", "NCHW")
    y = lax.conv_general_dilated(x_nchw, w1, (1, 1), "VALID", dimension_numbers=dn)
    y = jnp.maximum(y + b1.reshape(1, Ct, 1, 1), 0.0)
    y = lax.conv_general_dilated(y, w2, (1, 1), "VALID", dimension_numbers=dn)
    y = jnp.maximum(y + b2.reshape(1, Ct, 1, 1), 0.0)
    return y.reshape(y.shape[0], -1)


if __name__ == "__main__":
    # Small shapes consistent with the module: in_channels=4, c_tag=8.
    N, Cin, H, W = 2, 4, 16, 16
    C_TAG = 8

    key = jax.random.PRNGKey(0)
    k_x, k_w1, k_b1, k_w2, k_b2 = jax.random.split(key, 5)
    x = jax.random.normal(k_x, (N, Cin, H, W), jnp.float32)
    # PyTorch Conv2d weight layouts: (out_channels, in_channels, kh, kw).
    w1 = jax.random.normal(k_w1, (C_TAG, Cin, 3, 1), jnp.float32) * 0.1
    b1 = jax.random.normal(k_b1, (C_TAG,), jnp.float32) * 0.1
    w2 = jax.random.normal(k_w2, (C_TAG, C_TAG, 1, 3), jnp.float32) * 0.1
    b2 = jax.random.normal(k_b2, (C_TAG,), jnp.float32) * 0.1

    out = jax.block_until_ready(aux_conv_forward(x, w1, b1, w2, b2))

    ref = _reference_forward(x, w1, b1, w2, b2)
    assert out.shape == (N, C_TAG * (H - 2) * (W - 2)), out.shape
    assert jnp.allclose(out, ref, atol=1e-4, rtol=1e-4), "mismatch vs reference"

    print("KERNEL_OK")
</pallas_src>

<mosaic_0001>
module attributes {stable_mosaic.version = 11 : i64} {
  func.func @_aux_conv_kernel(%arg0: i32, %arg1: memref<2x4x256xf32, #tpu.memory_space<vmem>>, %arg2: memref<3x8x4xf32, #tpu.memory_space<vmem>>, %arg3: memref<8x1xf32, #tpu.memory_space<vmem>>, %arg4: memref<3x8x8xf32, #tpu.memory_space<vmem>>, %arg5: memref<8x1xf32, #tpu.memory_space<vmem>>, %arg6: memref<2x8x196xf32, #tpu.memory_space<vmem>>) attributes {dimension_semantics = [#tpu.dimension_semantics<parallel>], iteration_bounds = array<i64: 1>, scalar_prefetch = 0 : i64, scratch_operands = 0 : i64, tpu.core_type = #tpu.core_type<tc>, window_params = [{transform_indices = @transform_0, window_bounds = array<i64: 2, 4, 256>}, {pipeline_mode = #tpu.pipeline_mode<synchronous>, transform_indices = @transform_1, window_bounds = array<i64: 3, 8, 4>}, {pipeline_mode = #tpu.pipeline_mode<synchronous>, transform_indices = @transform_2, window_bounds = array<i64: 8, 1>}, {pipeline_mode = #tpu.pipeline_mode<synchronous>, transform_indices = @transform_3, window_bounds = array<i64: 3, 8, 8>}, {pipeline_mode = #tpu.pipeline_mode<synchronous>, transform_indices = @transform_4, window_bounds = array<i64: 8, 1>}, {transform_indices = @transform_5, window_bounds = array<i64: 2, 8, 196>}]} {
    %c0 = arith.constant 0 : index
    %c0_0 = arith.constant 0 : index
    %c0_1 = arith.constant 0 : index
    %0 = vector.load %arg2[%c0, %c0_0, %c0_1] : memref<3x8x4xf32, #tpu.memory_space<vmem>>, vector<1x8x4xf32>
    %1 = vector.shape_cast %0 : vector<1x8x4xf32> to vector<8x4xf32>
    %c1 = arith.constant 1 : index
    %c0_2 = arith.constant 0 : index
    %c0_3 = arith.constant 0 : index
    %2 = vector.load %arg2[%c1, %c0_2, %c0_3] : memref<3x8x4xf32, #tpu.memory_space<vmem>>, vector<1x8x4xf32>
    %3 = vector.shape_cast %2 : vector<1x8x4xf32> to vector<8x4xf32>
    %c2 = arith.constant 2 : index
    %c0_4 = arith.constant 0 : index
    %c0_5 = arith.constant 0 : index
    %4 = vector.load %arg2[%c2, %c0_4, %c0_5] : memref<3x8x4xf32, #tpu.memory_space<vmem>>, vector<1x8x4xf32>
    %5 = vector.shape_cast %4 : vector<1x8x4xf32> to vector<8x4xf32>
    %c0_6 = arith.constant 0 : index
    %c0_7 = arith.constant 0 : index
    %c0_8 = arith.constant 0 : index
    %6 = vector.load %arg4[%c0_6, %c0_7, %c0_8] : memref<3x8x8xf32, #tpu.memory_space<vmem>>, vector<1x8x8xf32>
    %7 = vector.shape_cast %6 : vector<1x8x8xf32> to vector<8x8xf32>
    %c1_9 = arith.constant 1 : index
    %c0_10 = arith.constant 0 : index
    %c0_11 = arith.constant 0 : index
    %8 = vector.load %arg4[%c1_9, %c0_10, %c0_11] : memref<3x8x8xf32, #tpu.memory_space<vmem>>, vector<1x8x8xf32>
    %9 = vector.shape_cast %8 : vector<1x8x8xf32> to vector<8x8xf32>
    %c2_12 = arith.constant 2 : index
    %c0_13 = arith.constant 0 : index
    %c0_14 = arith.constant 0 : index
    %10 = vector.load %arg4[%c2_12, %c0_13, %c0_14] : memref<3x8x8xf32, #tpu.memory_space<vmem>>, vector<1x8x8xf32>
    %11 = vector.shape_cast %10 : vector<1x8x8xf32> to vector<8x8xf32>
    %c0_15 = arith.constant 0 : index
    %c0_16 = arith.constant 0 : index
    %12 = vector.load %arg3[%c0_15, %c0_16] : memref<8x1xf32, #tpu.memory_space<vmem>>, vector<8x1xf32>
    %c0_17 = arith.constant 0 : index
    %c0_18 = arith.constant 0 : index
    %13 = vector.load %arg5[%c0_17, %c0_18] : memref<8x1xf32, #tpu.memory_space<vmem>>, vector<8x1xf32>
    %c0_19 = arith.constant 0 : index
    %c0_20 = arith.constant 0 : index
    %c0_21 = arith.constant 0 : index
    %14 = vector.load %arg1[%c0_19, %c0_20, %c0_21] : memref<2x4x256xf32, #tpu.memory_space<vmem>>, vector<1x4x256xf32>
    %15 = vector.shape_cast %14 : vector<1x4x256xf32> to vector<4x256xf32>
    %16 = vector.extract_strided_slice %15 {offsets = [0, 0], sizes = [4, 224], strides = [1, 1]} : vector<4x256xf32> to vector<4x224xf32>
    %cst = arith.constant dense<0.000000e+00> : vector<8x224xf32>
    %17 = tpu.matmul %1, %16, %cst {dimension_numbers = #tpu.dot_dimension_numbers<[1], [0], [0], [1], [0, 0, 1, 1], [], []>} : vector<8x4xf32>, vector<4x224xf32>, vector<8x224xf32> -> vector<8x224xf32>
    %18 = vector.extract_strided_slice %15 {offsets = [0, 16], sizes = [4, 224], strides = [1, 1]} : vector<4x256xf32> to vector<4x224xf32>
    %cst_22 = arith.constant dense<0.000000e+00> : vector<8x224xf32>
    %19 = tpu.matmul %3, %18, %cst_22 {dimension_numbers = #tpu.dot_dimension_numbers<[1], [0], [0], [1], [0, 0, 1, 1], [], []>} : vector<8x4xf32>, vector<4x224xf32>, vector<8x224xf32> -> vector<8x224xf32>
    %20 = arith.addf %17, %19 : vector<8x224xf32>
    %21 = vector.extract_strided_slice %15 {offsets = [0, 32], sizes = [4, 224], strides = [1, 1]} : vector<4x256xf32> to vector<4x224xf32>
    %cst_23 = arith.constant dense<0.000000e+00> : vector<8x224xf32>
    %22 = tpu.matmul %5, %21, %cst_23 {dimension_numbers = #tpu.dot_dimension_numbers<[1], [0], [0], [1], [0, 0, 1, 1], [], []>} : vector<8x4xf32>, vector<4x224xf32>, vector<8x224xf32> -> vector<8x224xf32>
    %23 = arith.addf %20, %22 : vector<8x224xf32>
    %24 = vector.broadcast %12 : vector<8x1xf32> to vector<8x224xf32>
    %25 = arith.addf %23, %24 : vector<8x224xf32>
    %cst_24 = arith.constant 0.000000e+00 : f32
    %26 = vector.broadcast %cst_24 : f32 to vector<8x224xf32>
    %27 = arith.maximumf %25, %26 : vector<8x224xf32>
    %28 = vector.extract_strided_slice %27 {offsets = [0, 0], sizes = [8, 222], strides = [1, 1]} : vector<8x224xf32> to vector<8x222xf32>
    %cst_25 = arith.constant dense<0.000000e+00> : vector<8x222xf32>
    %29 = tpu.matmul %7, %28, %cst_25 {dimension_numbers = #tpu.dot_dimension_numbers<[1], [0], [0], [1], [0, 0, 1, 1], [], []>} : vector<8x8xf32>, vector<8x222xf32>, vector<8x222xf32> -> vector<8x222xf32>
    %30 = vector.extract_strided_slice %27 {offsets = [0, 1], sizes = [8, 222], strides = [1, 1]} : vector<8x224xf32> to vector<8x222xf32>
    %cst_26 = arith.constant dense<0.000000e+00> : vector<8x222xf32>
    %31 = tpu.matmul %9, %30, %cst_26 {dimension_numbers = #tpu.dot_dimension_numbers<[1], [0], [0], [1], [0, 0, 1, 1], [], []>} : vector<8x8xf32>, vector<8x222xf32>, vector<8x222xf32> -> vector<8x222xf32>
    %32 = arith.addf %29, %31 : vector<8x222xf32>
    %33 = vector.extract_strided_slice %27 {offsets = [0, 2], sizes = [8, 222], strides = [1, 1]} : vector<8x224xf32> to vector<8x222xf32>
    %cst_27 = arith.constant dense<0.000000e+00> : vector<8x222xf32>
    %34 = tpu.matmul %11, %33, %cst_27 {dimension_numbers = #tpu.dot_dimension_numbers<[1], [0], [0], [1], [0, 0, 1, 1], [], []>} : vector<8x8xf32>, vector<8x222xf32>, vector<8x222xf32> -> vector<8x222xf32>
    %35 = arith.addf %32, %34 : vector<8x222xf32>
    %36 = vector.broadcast %13 : vector<8x1xf32> to vector<8x222xf32>
    %37 = arith.addf %35, %36 : vector<8x222xf32>
    %cst_28 = arith.constant 0.000000e+00 : f32
    %38 = vector.broadcast %cst_28 : f32 to vector<8x222xf32>
    %39 = arith.maximumf %37, %38 : vector<8x222xf32>
    %40 = vector.extract_strided_slice %39 {offsets = [0, 0], sizes = [8, 14], strides = [1, 1]} : vector<8x222xf32> to vector<8x14xf32>
    %41 = vector.extract_strided_slice %39 {offsets = [0, 16], sizes = [8, 14], strides = [1, 1]} : vector<8x222xf32> to vector<8x14xf32>
    %42 = vector.extract_strided_slice %39 {offsets = [0, 32], sizes = [8, 14], strides = [1, 1]} : vector<8x222xf32> to vector<8x14xf32>
    %43 = vector.extract_strided_slice %39 {offsets = [0, 48], sizes = [8, 14], strides = [1, 1]} : vector<8x222xf32> to vector<8x14xf32>
    %44 = vector.extract_strided_slice %39 {offsets = [0, 64], sizes = [8, 14], strides = [1, 1]} : vector<8x222xf32> to vector<8x14xf32>
    %45 = vector.extract_strided_slice %39 {offsets = [0, 80], sizes = [8, 14], strides = [1, 1]} : vector<8x222xf32> to vector<8x14xf32>
    %46 = vector.extract_strided_slice %39 {offsets = [0, 96], sizes = [8, 14], strides = [1, 1]} : vector<8x222xf32> to vector<8x14xf32>
    %47 = vector.extract_strided_slice %39 {offsets = [0, 112], sizes = [8, 14], strides = [1, 1]} : vector<8x222xf32> to vector<8x14xf32>
    %48 = vector.extract_strided_slice %39 {offsets = [0, 128], sizes = [8, 14], strides = [1, 1]} : vector<8x222xf32> to vector<8x14xf32>
    %49 = vector.extract_strided_slice %39 {offsets = [0, 144], sizes = [8, 14], strides = [1, 1]} : vector<8x222xf32> to vector<8x14xf32>
    %50 = vector.extract_strided_slice %39 {offsets = [0, 160], sizes = [8, 14], strides = [1, 1]} : vector<8x222xf32> to vector<8x14xf32>
    %51 = vector.extract_strided_slice %39 {offsets = [0, 176], sizes = [8, 14], strides = [1, 1]} : vector<8x222xf32> to vector<8x14xf32>
    %52 = vector.extract_strided_slice %39 {offsets = [0, 192], sizes = [8, 14], strides = [1, 1]} : vector<8x222xf32> to vector<8x14xf32>
    %53 = vector.extract_strided_slice %39 {offsets = [0, 208], sizes = [8, 14], strides = [1, 1]} : vector<8x222xf32> to vector<8x14xf32>
    %54 = tpu.concatenate %40, %41, %42, %43, %44, %45, %46, %47, %48, %49, %50, %51, %52, %53 in 1 : vector<8x14xf32>, vector<8x14xf32>, vector<8x14xf32>, vector<8x14xf32>, vector<8x14xf32>, vector<8x14xf32>, vector<8x14xf32>, vector<8x14xf32>, vector<8x14xf32>, vector<8x14xf32>, vector<8x14xf32>, vector<8x14xf32>, vector<8x14xf32>, vector<8x14xf32> -> vector<8x196xf32>
    %c0_29 = arith.constant 0 : index
    %c0_30 = arith.constant 0 : index
    %c0_31 = arith.constant 0 : index
    %55 = vector.load %arg6[%c0_29, %c0_30, %c0_31] : memref<2x8x196xf32, #tpu.memory_space<vmem>>, vector<1x8x196xf32>
    %56 = vector.shape_cast %55 : vector<1x8x196xf32> to vector<8x196xf32>
    %57 = vector.shape_cast %54 : vector<8x196xf32> to vector<1x8x196xf32>
    tpu.vector_store %arg6[%c0_29, %c0_30, %c0_31], %57 {strides = array<i32>} : memref<2x8x196xf32, #tpu.memory_space<vmem>>, vector<1x8x196xf32>,
    %c1_32 = arith.constant 1 : index
    %c0_33 = arith.constant 0 : index
    %c0_34 = arith.constant 0 : index
    %58 = vector.load %arg1[%c1_32, %c0_33, %c0_34] : memref<2x4x256xf32, #tpu.memory_space<vmem>>, vector<1x4x256xf32>
    %59 = vector.shape_cast %58 : vector<1x4x256xf32> to vector<4x256xf32>
    %60 = vector.extract_strided_slice %59 {offsets = [0, 0], sizes = [4, 224], strides = [1, 1]} : vector<4x256xf32> to vector<4x224xf32>
    %cst_35 = arith.constant dense<0.000000e+00> : vector<8x224xf32>
    %61 = tpu.matmul %1, %60, %cst_35 {dimension_numbers = #tpu.dot_dimension_numbers<[1], [0], [0], [1], [0, 0, 1, 1], [], []>} : vector<8x4xf32>, vector<4x224xf32>, vector<8x224xf32> -> vector<8x224xf32>
    %62 = vector.extract_strided_slice %59 {offsets = [0, 16], sizes = [4, 224], strides = [1, 1]} : vector<4x256xf32> to vector<4x224xf32>
    %cst_36 = arith.constant dense<0.000000e+00> : vector<8x224xf32>
    %63 = tpu.matmul %3, %62, %cst_36 {dimension_numbers = #tpu.dot_dimension_numbers<[1], [0], [0], [1], [0, 0, 1, 1], [], []>} : vector<8x4xf32>, vector<4x224xf32>, vector<8x224xf32> -> vector<8x224xf32>
    %64 = arith.addf %61, %63 : vector<8x224xf32>
    %65 = vector.extract_strided_slice %59 {offsets = [0, 32], sizes = [4, 224], strides = [1, 1]} : vector<4x256xf32> to vector<4x224xf32>
    %cst_37 = arith.constant dense<0.000000e+00> : vector<8x224xf32>
    %66 = tpu.matmul %5, %65, %cst_37 {dimension_numbers = #tpu.dot_dimension_numbers<[1], [0], [0], [1], [0, 0, 1, 1], [], []>} : vector<8x4xf32>, vector<4x224xf32>, vector<8x224xf32> -> vector<8x224xf32>
    %67 = arith.addf %64, %66 : vector<8x224xf32>
    %68 = vector.broadcast %12 : vector<8x1xf32> to vector<8x224xf32>
    %69 = arith.addf %67, %68 : vector<8x224xf32>
    %cst_38 = arith.constant 0.000000e+00 : f32
    %70 = vector.broadcast %cst_38 : f32 to vector<8x224xf32>
    %71 = arith.maximumf %69, %70 : vector<8x224xf32>
    %72 = vector.extract_strided_slice %71 {offsets = [0, 0], sizes = [8, 222], strides = [1, 1]} : vector<8x224xf32> to vector<8x222xf32>
    %cst_39 = arith.constant dense<0.000000e+00> : vector<8x222xf32>
    %73 = tpu.matmul %7, %72, %cst_39 {dimension_numbers = #tpu.dot_dimension_numbers<[1], [0], [0], [1], [0, 0, 1, 1], [], []>} : vector<8x8xf32>, vector<8x222xf32>, vector<8x222xf32> -> vector<8x222xf32>
    %74 = vector.extract_strided_slice %71 {offsets = [0, 1], sizes = [8, 222], strides = [1, 1]} : vector<8x224xf32> to vector<8x222xf32>
    %cst_40 = arith.constant dense<0.000000e+00> : vector<8x222xf32>
    %75 = tpu.matmul %9, %74, %cst_40 {dimension_numbers = #tpu.dot_dimension_numbers<[1], [0], [0], [1], [0, 0, 1, 1], [], []>} : vector<8x8xf32>, vector<8x222xf32>, vector<8x222xf32> -> vector<8x222xf32>
    %76 = arith.addf %73, %75 : vector<8x222xf32>
    %77 = vector.extract_strided_slice %71 {offsets = [0, 2], sizes = [8, 222], strides = [1, 1]} : vector<8x224xf32> to vector<8x222xf32>
    %cst_41 = arith.constant dense<0.000000e+00> : vector<8x222xf32>
    %78 = tpu.matmul %11, %77, %cst_41 {dimension_numbers = #tpu.dot_dimension_numbers<[1], [0], [0], [1], [0, 0, 1, 1], [], []>} : vector<8x8xf32>, vector<8x222xf32>, vector<8x222xf32> -> vector<8x222xf32>
    %79 = arith.addf %76, %78 : vector<8x222xf32>
    %80 = vector.broadcast %13 : vector<8x1xf32> to vector<8x222xf32>
    %81 = arith.addf %79, %80 : vector<8x222xf32>
    %cst_42 = arith.constant 0.000000e+00 : f32
    %82 = vector.broadcast %cst_42 : f32 to vector<8x222xf32>
    %83 = arith.maximumf %81, %82 : vector<8x222xf32>
    %84 = vector.extract_strided_slice %83 {offsets = [0, 0], sizes = [8, 14], strides = [1, 1]} : vector<8x222xf32> to vector<8x14xf32>
    %85 = vector.extract_strided_slice %83 {offsets = [0, 16], sizes = [8, 14], strides = [1, 1]} : vector<8x222xf32> to vector<8x14xf32>
    %86 = vector.extract_strided_slice %83 {offsets = [0, 32], sizes = [8, 14], strides = [1, 1]} : vector<8x222xf32> to vector<8x14xf32>
    %87 = vector.extract_strided_slice %83 {offsets = [0, 48], sizes = [8, 14], strides = [1, 1]} : vector<8x222xf32> to vector<8x14xf32>
    %88 = vector.extract_strided_slice %83 {offsets = [0, 64], sizes = [8, 14], strides = [1, 1]} : vector<8x222xf32> to vector<8x14xf32>
    %89 = vector.extract_strided_slice %83 {offsets = [0, 80], sizes = [8, 14], strides = [1, 1]} : vector<8x222xf32> to vector<8x14xf32>
    %90 = vector.extract_strided_slice %83 {offsets = [0, 96], sizes = [8, 14], strides = [1, 1]} : vector<8x222xf32> to vector<8x14xf32>
    %91 = vector.extract_strided_slice %83 {offsets = [0, 112], sizes = [8, 14], strides = [1, 1]} : vector<8x222xf32> to vector<8x14xf32>
    %92 = vector.extract_strided_slice %83 {offsets = [0, 128], sizes = [8, 14], strides = [1, 1]} : vector<8x222xf32> to vector<8x14xf32>
    %93 = vector.extract_strided_slice %83 {offsets = [0, 144], sizes = [8, 14], strides = [1, 1]} : vector<8x222xf32> to vector<8x14xf32>
    %94 = vector.extract_strided_slice %83 {offsets = [0, 160], sizes = [8, 14], strides = [1, 1]} : vector<8x222xf32> to vector<8x14xf32>
    %95 = vector.extract_strided_slice %83 {offsets = [0, 176], sizes = [8, 14], strides = [1, 1]} : vector<8x222xf32> to vector<8x14xf32>
    %96 = vector.extract_strided_slice %83 {offsets = [0, 192], sizes = [8, 14], strides = [1, 1]} : vector<8x222xf32> to vector<8x14xf32>
    %97 = vector.extract_strided_slice %83 {offsets = [0, 208], sizes = [8, 14], strides = [1, 1]} : vector<8x222xf32> to vector<8x14xf32>
    %98 = tpu.concatenate %84, %85, %86, %87, %88, %89, %90, %91, %92, %93, %94, %95, %96, %97 in 1 : vector<8x14xf32>, vector<8x14xf32>, vector<8x14xf32>, vector<8x14xf32>, vector<8x14xf32>, vector<8x14xf32>, vector<8x14xf32>, vector<8x14xf32>, vector<8x14xf32>, vector<8x14xf32>, vector<8x14xf32>, vector<8x14xf32>, vector<8x14xf32>, vector<8x14xf32> -> vector<8x196xf32>
    %c1_43 = arith.constant 1 : index
    %c0_44 = arith.constant 0 : index
    %c0_45 = arith.constant 0 : index
    %99 = vector.load %arg6[%c1_43, %c0_44, %c0_45] : memref<2x8x196xf32, #tpu.memory_space<vmem>>, vector<1x8x196xf32>
    %100 = vector.shape_cast %99 : vector<1x8x196xf32> to vector<8x196xf32>
    %101 = vector.shape_cast %98 : vector<8x196xf32> to vector<1x8x196xf32>
    tpu.vector_store %arg6[%c1_43, %c0_44, %c0_45], %101 {strides = array<i32>} : memref<2x8x196xf32, #tpu.memory_space<vmem>>, vector<1x8x196xf32>,
    return
  }
  func.func @transform_0(%arg0: i32) -> (i32, i32, i32) {
    %c0_i32 = arith.constant 0 : i32
    %c0_i32_0 = arith.constant 0 : i32
    %c0_i32_1 = arith.constant 0 : i32
    return %arg0, %c0_i32, %c0_i32_0 : i32, i32, i32
  }
  func.func @transform_1(%arg0: i32) -> (i32, i32, i32) {
    %c0_i32 = arith.constant 0 : i32
    %c0_i32_0 = arith.constant 0 : i32
    %c0_i32_1 = arith.constant 0 : i32
    %c0_i32_2 = arith.constant 0 : i32
    return %c0_i32, %c0_i32_0, %c0_i32_1 : i32, i32, i32
  }
  func.func @transform_2(%arg0: i32) -> (i32, i32) {
    %c0_i32 = arith.constant 0 : i32
    %c0_i32_0 = arith.constant 0 : i32
    %c0_i32_1 = arith.constant 0 : i32
    return %c0_i32, %c0_i32_0 : i32, i32
  }
  func.func @transform_3(%arg0: i32) -> (i32, i32, i32) {
    %c0_i32 = arith.constant 0 : i32
    %c0_i32_0 = arith.constant 0 : i32
    %c0_i32_1 = arith.constant 0 : i32
    %c0_i32_2 = arith.constant 0 : i32
    return %c0_i32, %c0_i32_0, %c0_i32_1 : i32, i32, i32
  }
  func.func @transform_4(%arg0: i32) -> (i32, i32) {
    %c0_i32 = arith.constant 0 : i32
    %c0_i32_0 = arith.constant 0 : i32
    %c0_i32_1 = arith.constant 0 : i32
    return %c0_i32, %c0_i32_0 : i32, i32
  }
  func.func @transform_5(%arg0: i32) -> (i32, i32, i32) {
    %c0_i32 = arith.constant 0 : i32
    %c0_i32_0 = arith.constant 0 : i32
    %c0_i32_1 = arith.constant 0 : i32
    return %arg0, %c0_i32, %c0_i32_0 : i32, i32, i32
  }
}

</mosaic_0001>

<llo_original>
// kernel: aux_conv_forward.1
$region0: #{aux_conv_forward.1}
  #allocation0 [shape = 'u32[]', space=smem, size = 0x4, offset = 0x4, fixed_abs, tag = 'smem constant byte address 0x4 - core index']
  #allocation1 [shape = 'u32[144,128]{1,0:T(1,128)}', space=vmem, size = 0x12000, scoped, tag = 'internal scratch']
  %s0 = inlined_call_operand.vmem [shape: f32[2,4,256], index: 0, kind: input, shape index: {}]
  %s1 = inlined_call_operand.vmem [shape: f32[3,8,4], index: 1, kind: input, shape index: {}]
  %s2 = inlined_call_operand.vmem [shape: f32[8,1], index: 2, kind: input, shape index: {}]
  %s3 = inlined_call_operand.vmem [shape: f32[3,8,8], index: 3, kind: input, shape index: {}]
  %s4 = inlined_call_operand.vmem [shape: f32[8,1], index: 4, kind: input, shape index: {}]
  %s5 = inlined_call_operand.vmem [shape: f32[2,8,196], index: 5, kind: output, shape index: {}]
  %s6 = sld [smem:[#allocation0]]
  $region30: #{aux_conv_forward.1} parent=0
    _
  %s8 = ssub.s32 1, %s6
  %s9 = scalar_select 0, %s8, %s6
  // Predicated region
  $region2: #{aux_conv_forward.1} parent=0 // pred_check
    _
  $region3: #{aux_conv_forward.1} parent=0 // pred_check_branch
    %11 = sbr.rel (0) target = $region5
  $region4: #{aux_conv_forward.1} parent=0 // pred_region
    _
  $region5: #{aux_conv_forward.1} parent=0 // pred_fallthru
    _
  // Predicated region
  $region6: #{aux_conv_forward.1} parent=0 // pred_check
    _
  $region7: #{aux_conv_forward.1} parent=0 // pred_check_branch
    %13 = sbr.rel (0) target = $region9
  $region8: #{aux_conv_forward.1} parent=0 // pred_region
    _
  $region9: #{aux_conv_forward.1} parent=0 // pred_fallthru
    _
  // Predicated region
  $region10: #{aux_conv_forward.1} parent=0 // pred_check
    _
  $region11: #{aux_conv_forward.1} parent=0 // pred_check_branch
    %15 = sbr.rel (0) target = $region13
  $region12: #{aux_conv_forward.1} parent=0 // pred_region
    _
  $region13: #{aux_conv_forward.1} parent=0 // pred_fallthru
    _
  // Predicated region
  $region14: #{aux_conv_forward.1} parent=0 // pred_check
    _
  $region15: #{aux_conv_forward.1} parent=0 // pred_check_branch
    %17 = sbr.rel (0) target = $region17
  $region16: #{aux_conv_forward.1} parent=0 // pred_region
    _
  $region17: #{aux_conv_forward.1} parent=0 // pred_fallthru
    _
  // Predicated region
  $region18: #{aux_conv_forward.1} parent=0 // pred_check
    _
  $region19: #{aux_conv_forward.1} parent=0 // pred_check_branch
    %19 = sbr.rel (0) target = $region21
  $region20: #{aux_conv_forward.1} parent=0 // pred_region
    _
  $region21: #{aux_conv_forward.1} parent=0 // pred_fallthru
    _
  %v20 = vld [vmem:[%s1] sm:$0xff]
  %s21 = scalar_lea.vmem %s1, 8
  %v22 = vld [vmem:[%s21] sm:$0xff]
  %s23 = scalar_lea.vmem %s1, 16
  %v24 = vld [vmem:[%s23] sm:$0xff]
  %v25 = vld [vmem:[%s3] sm:$0xff]
  %s26 = scalar_lea.vmem %s3, 8
  %v27 = vld [vmem:[%s26] sm:$0xff]
  %s28 = scalar_lea.vmem %s3, 16
  %v29 = vld [vmem:[%s28] sm:$0xff]
  %v30 = vld [vmem:[%s2] sm:$0xff]
  %v31 = vld [vmem:[%s4] sm:$0xff]
  %v32 = vld [vmem:[%s0] sm:$0xff]
  %v34 = vcombine.high %v32, %v32
  %35 = vrot.lane.b32.xlu0 %v32, 112
  %v36 = vpop.permute.xlu0 %35
  %37 = vrot.lane.b32.xlu0 %v34, 112
  %v38 = vpop.permute.xlu0 %37
  %vm39 = vcmask 916480
  %v40 = vsel %vm39, %v36, %v38
  %vm41 = vcmask 31744
  %v43 = vsel %vm41, %v22, 0
  %vm45 = vcmask 1043456
  %v46 = vsel %vm45, %v40, 0
  %v48 = vsel %vm45, %v38, 0
  %50 = vmatprep.subr.mxu0 %v48
  %51 = vmatpush1.msra.mxu0 %v46
  %52 = vmatprep.subr.mxu0 0.0
  %53 = vmatpush1.msra.mxu0 0.0
  %54 = vmatprep.subr.mxu0 0.0
  %55 = vmatpush1.msra.mxu0 0.0
  %56 = vmatprep.subr.mxu0 0.0
  %57 = vmatpush1.msra.mxu0 0.0
  %58 = vmatprep.subr.mxu0 0.0
  %59 = vmatpush1.msra.mxu0 0.0
  %60 = vmatprep.subr.mxu0 0.0
  %61 = vmatpush1.msra.mxu0 0.0
  %62 = vmatprep.subr.mxu0 0.0
  %63 = vmatpush1.msra.mxu0 0.0
  %64 = vmatprep.subr.mxu0 0.0
  %65 = vmatpush1.msra.mxu0 0.0
  %66 = vmatprep.subr.mxu0 0.0
  %67 = vmatpush1.msra.mxu0 0.0
  %68 = vmatprep.subr.mxu0 0.0
  %69 = vmatpush1.msra.mxu0 0.0
  %70 = vmatprep.subr.mxu0 0.0
  %71 = vmatpush1.msra.mxu0 0.0
  %72 = vmatprep.subr.mxu0 0.0
  %73 = vmatpush1.msra.mxu0 0.0
  %74 = vmatprep.subr.mxu0 0.0
  %75 = vmatpush1.msra.mxu0 0.0
  %76 = vmatprep.subr.mxu0 0.0
  %77 = vmatpush1.msra.mxu0 0.0
  %78 = vmatprep.subr.mxu0 0.0
  %79 = vmatpush1.msra.mxu0 0.0
  %80 = vmatprep.subr.mxu0 0.0
  %81 = vmatpush1.msra.mxu0 0.0
  %82 = vmatprep.subr.mxu0 0.0
  %83 = vmatpush1.msra.mxu0 0.0
  %84 = vmatprep.subr.mxu0 0.0
  %85 = vmatpush1.msra.mxu0 0.0
  %86 = vmatprep.subr.mxu0 0.0
  %87 = vmatpush1.msra.mxu0 0.0
  %88 = vmatprep.subr.mxu0 0.0
  %89 = vmatpush1.msra.mxu0 0.0
  %90 = vmatprep.subr.mxu0 0.0
  %91 = vmatpush1.msra.mxu0 0.0
  %92 = vmatprep.subr.mxu0 0.0
  %93 = vmatpush1.msra.mxu0 0.0
  %94 = vmatprep.subr.mxu0 0.0
  %95 = vmatpush1.msra.mxu0 0.0
  %96 = vmatprep.subr.mxu0 0.0
  %97 = vmatpush1.msra.mxu0 0.0
  %98 = vmatprep.subr.mxu0 0.0
  %99 = vmatpush1.msra.mxu0 0.0
  %100 = vmatprep.subr.mxu0 0.0
  %101 = vmatpush1.msra.mxu0 0.0
  %102 = vmatprep.subr.mxu0 0.0
  %103 = vmatpush1.msra.mxu0 0.0
  %104 = vmatprep.subr.mxu0 0.0
  %105 = vmatpush1.msra.mxu0 0.0
  %106 = vmatprep.subr.mxu0 0.0
  %107 = vmatpush1.msra.mxu0 0.0
  %108 = vmatprep.subr.mxu0 0.0
  %109 = vmatpush1.msra.mxu0 0.0
  %110 = vmatprep.subr.mxu0 0.0
  %111 = vmatpush1.msra.mxu0 0.0
  %112 = vmatprep.subr.mxu0 0.0
  %113 = vmatpush1.msra.mxu0 0.0
  %114 = vmatprep.mubr.f32.mxu0 0.0
  %115 = vmatmul.mubr.f32.gmra.mrb[0].mxu0 %v43
  %v116 = vpop.f32.mrb[0].mxu0
  %v117 = vadd.f32 0.0, %v116
  %v118 = vpop.f32.mrb[0].mxu0
  %v119 = vadd.f32 0.0, %v118
  %120 = vdwg.mxu0
  %v122 = vsel %vm41, %v20, 0
  %v124 = vsel %vm45, %v32, 0
  %v126 = vsel %vm45, %v34, 0
  %128 = vmatprep.subr.mxu0 %v126
  %129 = vmatpush1.msra.mxu0 %v124
  %130 = vmatprep.subr.mxu0 0.0
  %131 = vmatpush1.msra.mxu0 0.0
  %132 = vmatprep.subr.mxu0 0.0
  %133 = vmatpush1.msra.mxu0 0.0
  %134 = vmatprep.subr.mxu0 0.0
  %135 = vmatpush1.msra.mxu0 0.0
  %136 = vmatprep.subr.mxu0 0.0
  %137 = vmatpush1.msra.mxu0 0.0
  %138 = vmatprep.subr.mxu0 0.0
  %139 = vmatpush1.msra.mxu0 0.0
  %140 = vmatprep.subr.mxu0 0.0
  %141 = vmatpush1.msra.mxu0 0.0
  %142 = vmatprep.subr.mxu0 0.0
  %143 = vmatpush1.msra.mxu0 0.0
  %144 = vmatprep.subr.mxu0 0.0
  %145 = vmatpush1.msra.mxu0 0.0
  %146 = vmatprep.subr.mxu0 0.0
  %147 = vmatpush1.msra.mxu0 0.0
  %148 = vmatprep.subr.mxu0 0.0
  %149 = vmatpush1.msra.mxu0 0.0
  %150 = vmatprep.subr.mxu0 0.0
  %151 = vmatpush1.msra.mxu0 0.0
  %152 = vmatprep.subr.mxu0 0.0
  %153 = vmatpush1.msra.mxu0 0.0
  %154 = vmatprep.subr.mxu0 0.0
  %155 = vmatpush1.msra.mxu0 0.0
  %156 = vmatprep.subr.mxu0 0.0
  %157 = vmatpush1.msra.mxu0 0.0
  %158 = vmatprep.subr.mxu0 0.0
  %159 = vmatpush1.msra.mxu0 0.0
  %160 = vmatprep.subr.mxu0 0.0
  %161 = vmatpush1.msra.mxu0 0.0
  %162 = vmatprep.subr.mxu0 0.0
  %163 = vmatpush1.msra.mxu0 0.0
  %164 = vmatprep.subr.mxu0 0.0
  %165 = vmatpush1.msra.mxu0 0.0
  %166 = vmatprep.subr.mxu0 0.0
  %167 = vmatpush1.msra.mxu0 0.0
  %168 = vmatprep.subr.mxu0 0.0
  %169 = vmatpush1.msra.mxu0 0.0
  %170 = vmatprep.subr.mxu0 0.0
  %171 = vmatpush1.msra.mxu0 0.0
  %172 = vmatprep.subr.mxu0 0.0
  %173 = vmatpush1.msra.mxu0 0.0
  %174 = vmatprep.subr.mxu0 0.0
  %175 = vmatpush1.msra.mxu0 0.0
  %176 = vmatprep.subr.mxu0 0.0
  %177 = vmatpush1.msra.mxu0 0.0
  %178 = vmatprep.subr.mxu0 0.0
  %179 = vmatpush1.msra.mxu0 0.0
  %180 = vmatprep.subr.mxu0 0.0
  %181 = vmatpush1.msra.mxu0 0.0
  %182 = vmatprep.subr.mxu0 0.0
  %183 = vmatpush1.msra.mxu0 0.0
  %184 = vmatprep.subr.mxu0 0.0
  %185 = vmatpush1.msra.mxu0 0.0
  %186 = vmatprep.subr.mxu0 0.0
  %187 = vmatpush1.msra.mxu0 0.0
  %188 = vmatprep.subr.mxu0 0.0
  %189 = vmatpush1.msra.mxu0 0.0
  %190 = vmatprep.subr.mxu0 0.0
  %191 = vmatpush1.msra.mxu0 0.0
  %192 = vmatprep.mubr.f32.mxu0 0.0
  %193 = vmatmul.mubr.f32.gmra.mrb[0].mxu0 %v122
  %v194 = vpop.f32.mrb[0].mxu0
  %v195 = vadd.f32 %v117, %v194
  %v196 = vpop.f32.mrb[0].mxu0
  %v197 = vadd.f32 %v119, %v196
  %198 = vdwg.mxu0
  %199 = vrot.lane.b32.xlu0 %v32, 96
  %v200 = vpop.permute.xlu0 %199
  %201 = vrot.lane.b32.xlu0 %v34, 96
  %v202 = vpop.permute.xlu0 %201
  %vm203 = vcmask 785408
  %v204 = vsel %vm203, %v200, %v202
  %v206 = vsel %vm41, %v24, 0
  %v208 = vsel %vm45, %v204, 0
  %v210 = vsel %vm45, %v202, 0
  %212 = vmatprep.subr.mxu0 %v210
  %213 = vmatpush1.msra.mxu0 %v208
  %214 = vmatprep.subr.mxu0 0.0
  %215 = vmatpush1.msra.mxu0 0.0
  %216 = vmatprep.subr.mxu0 0.0
  %217 = vmatpush1.msra.mxu0 0.0
  %218 = vmatprep.subr.mxu0 0.0
  %219 = vmatpush1.msra.mxu0 0.0
  %220 = vmatprep.subr.mxu0 0.0
  %221 = vmatpush1.msra.mxu0 0.0
  %222 = vmatprep.subr.mxu0 0.0
  %223 = vmatpush1.msra.mxu0 0.0
  %224 = vmatprep.subr.mxu0 0.0
  %225 = vmatpush1.msra.mxu0 0.0
  %226 = vmatprep.subr.mxu0 0.0
  %227 = vmatpush1.msra.mxu0 0.0
  %228 = vmatprep.subr.mxu0 0.0
  %229 = vmatpush1.msra.mxu0 0.0
  %230 = vmatprep.subr.mxu0 0.0
  %231 = vmatpush1.msra.mxu0 0.0
  %232 = vmatprep.subr.mxu0 0.0
  %233 = vmatpush1.msra.mxu0 0.0
  %234 = vmatprep.subr.mxu0 0.0
  %235 = vmatpush1.msra.mxu0 0.0
  %236 = vmatprep.subr.mxu0 0.0
  %237 = vmatpush1.msra.mxu0 0.0
  %238 = vmatprep.subr.mxu0 0.0
  %239 = vmatpush1.msra.mxu0 0.0
  %240 = vmatprep.subr.mxu0 0.0
  %241 = vmatpush1.msra.mxu0 0.0
  %242 = vmatprep.subr.mxu0 0.0
  %243 = vmatpush1.msra.mxu0 0.0
  %244 = vmatprep.subr.mxu0 0.0
  %245 = vmatpush1.msra.mxu0 0.0
  %246 = vmatprep.subr.mxu0 0.0
  %247 = vmatpush1.msra.mxu0 0.0
  %248 = vmatprep.subr.mxu0 0.0
  %249 = vmatpush1.msra.mxu0 0.0
  %250 = vmatprep.subr.mxu0 0.0
  %251 = vmatpush1.msra.mxu0 0.0
  %252 = vmatprep.subr.mxu0 0.0
  %253 = vmatpush1.msra.mxu0 0.0
  %254 = vmatprep.subr.mxu0 0.0
  %255 = vmatpush1.msra.mxu0 0.0
  %256 = vmatprep.subr.mxu0 0.0
  %257 = vmatpush1.msra.mxu0 0.0
  %258 = vmatprep.subr.mxu0 0.0
  %259 = vmatpush1.msra.mxu0 0.0
  %260 = vmatprep.subr.mxu0 0.0
  %261 = vmatpush1.msra.mxu0 0.0
  %262 = vmatprep.subr.mxu0 0.0
  %263 = vmatpush1.msra.mxu0 0.0
  %264 = vmatprep.subr.mxu0 0.0
  %265 = vmatpush1.msra.mxu0 0.0
  %266 = vmatprep.subr.mxu0 0.0
  %267 = vmatpush1.msra.mxu0 0.0
  %268 = vmatprep.subr.mxu0 0.0
  %269 = vmatpush1.msra.mxu0 0.0
  %270 = vmatprep.subr.mxu0 0.0
  %271 = vmatpush1.msra.mxu0 0.0
  %272 = vmatprep.subr.mxu0 0.0
  %273 = vmatpush1.msra.mxu0 0.0
  %274 = vmatprep.subr.mxu0 0.0
  %275 = vmatpush1.msra.mxu0 0.0
  %276 = vmatprep.mubr.f32.mxu0 0.0
  %277 = vmatmul.mubr.f32.gmra.mrb[0].mxu0 %v206
  %v278 = vpop.f32.mrb[0].mxu0
  %v279 = vadd.f32 0.0, %v278
  %v280 = vpop.f32.mrb[0].mxu0
  %v281 = vadd.f32 0.0, %v280
  %282 = vdwg.mxu0
  %v283 = vadd.f32 %v195, %v279
  %v284 = vadd.f32 %v197, %v281
  %286 = vset.pattern.permute.xlu0 0
  %287 = vperm.xlu0 %286, %v30
  %v288 = vpop.permute.xlu0 %287
  %v290 = vadd.f32 %v283, %v288
  %v291 = vadd.f32 %v284, %v288
  %v292 = vmax.f32 %v290, 0.0
  %v293 = vmax.f32 %v291, 0.0
  %296 = vrot.lane.b32.xlu0 %v292, 127
  %v297 = vpop.permute.xlu0 %296
  %298 = vrot.lane.b32.xlu0 %v293, 127
  %v299 = vpop.permute.xlu0 %298
  %vm300 = vcmask 1039360
  %v301 = vsel %vm300, %v297, %v299
  %vm304 = vcmask 64512
  %v306 = vsel %vm304, %v27, 0
  %308 = vmatprep.subr.mxu0 %v299
  %309 = vmatpush1.msra.mxu0 %v301
  %310 = vmatprep.subr.mxu0 0.0
  %311 = vmatpush1.msra.mxu0 0.0
  %312 = vmatprep.subr.mxu0 0.0
  %313 = vmatpush1.msra.mxu0 0.0
  %314 = vmatprep.subr.mxu0 0.0
  %315 = vmatpush1.msra.mxu0 0.0
  %316 = vmatprep.subr.mxu0 0.0
  %317 = vmatpush1.msra.mxu0 0.0
  %318 = vmatprep.subr.mxu0 0.0
  %319 = vmatpush1.msra.mxu0 0.0
  %320 = vmatprep.subr.mxu0 0.0
  %321 = vmatpush1.msra.mxu0 0.0
  %322 = vmatprep.subr.mxu0 0.0
  %323 = vmatpush1.msra.mxu0 0.0
  %324 = vmatprep.subr.mxu0 0.0
  %325 = vmatpush1.msra.mxu0 0.0
  %326 = vmatprep.subr.mxu0 0.0
  %327 = vmatpush1.msra.mxu0 0.0
  %328 = vmatprep.subr.mxu0 0.0
  %329 = vmatpush1.msra.mxu0 0.0
  %330 = vmatprep.subr.mxu0 0.0
  %331 = vmatpush1.msra.mxu0 0.0
  %332 = vmatprep.subr.mxu0 0.0
  %333 = vmatpush1.msra.mxu0 0.0
  %334 = vmatprep.subr.mxu0 0.0
  %335 = vmatpush1.msra.mxu0 0.0
  %336 = vmatprep.subr.mxu0 0.0
  %337 = vmatpush1.msra.mxu0 0.0
  %338 = vmatprep.subr.mxu0 0.0
  %339 = vmatpush1.msra.mxu0 0.0
  %340 = vmatprep.subr.mxu0 0.0
  %341 = vmatpush1.msra.mxu0 0.0
  %342 = vmatprep.subr.mxu0 0.0
  %343 = vmatpush1.msra.mxu0 0.0
  %344 = vmatprep.subr.mxu0 0.0
  %345 = vmatpush1.msra.mxu0 0.0
  %346 = vmatprep.subr.mxu0 0.0
  %347 = vmatpush1.msra.mxu0 0.0
  %348 = vmatprep.subr.mxu0 0.0
  %349 = vmatpush1.msra.mxu0 0.0
  %350 = vmatprep.subr.mxu0 0.0
  %351 = vmatpush1.msra.mxu0 0.0
  %352 = vmatprep.subr.mxu0 0.0
  %353 = vmatpush1.msra.mxu0 0.0
  %354 = vmatprep.subr.mxu0 0.0
  %355 = vmatpush1.msra.mxu0 0.0
  %356 = vmatprep.subr.mxu0 0.0
  %357 = vmatpush1.msra.mxu0 0.0
  %358 = vmatprep.subr.mxu0 0.0
  %359 = vmatpush1.msra.mxu0 0.0
  %360 = vmatprep.subr.mxu0 0.0
  %361 = vmatpush1.msra.mxu0 0.0
  %362 = vmatprep.subr.mxu0 0.0
  %363 = vmatpush1.msra.mxu0 0.0
  %364 = vmatprep.subr.mxu0 0.0
  %365 = vmatpush1.msra.mxu0 0.0
  %366 = vmatprep.subr.mxu0 0.0
  %367 = vmatpush1.msra.mxu0 0.0
  %368 = vmatprep.subr.mxu0 0.0
  %369 = vmatpush1.msra.mxu0 0.0
  %370 = vmatprep.subr.mxu0 0.0
  %371 = vmatpush1.msra.mxu0 0.0
  %372 = vmatprep.mubr.f32.mxu0 0.0
  %373 = vmatmul.mubr.f32.gmra.mrb[0].mxu0 %v306
  %v374 = vpop.f32.mrb[0].mxu0
  %v375 = vadd.f32 0.0, %v374
  %v376 = vpop.f32.mrb[0].mxu0
  %v377 = vadd.f32 0.0, %v376
  %378 = vdwg.mxu0
  %v380 = vsel %vm304, %v25, 0
  %382 = vmatprep.subr.mxu0 %v293
  %383 = vmatpush1.msra.mxu0 %v292
  %384 = vmatprep.subr.mxu0 0.0
  %385 = vmatpush1.msra.mxu0 0.0
  %386 = vmatprep.subr.mxu0 0.0
  %387 = vmatpush1.msra.mxu0 0.0
  %388 = vmatprep.subr.mxu0 0.0
  %389 = vmatpush1.msra.mxu0 0.0
  %390 = vmatprep.subr.mxu0 0.0
  %391 = vmatpush1.msra.mxu0 0.0
  %392 = vmatprep.subr.mxu0 0.0
  %393 = vmatpush1.msra.mxu0 0.0
  %394 = vmatprep.subr.mxu0 0.0
  %395 = vmatpush1.msra.mxu0 0.0
  %396 = vmatprep.subr.mxu0 0.0
  %397 = vmatpush1.msra.mxu0 0.0
  %398 = vmatprep.subr.mxu0 0.0
  %399 = vmatpush1.msra.mxu0 0.0
  %400 = vmatprep.subr.mxu0 0.0
  %401 = vmatpush1.msra.mxu0 0.0
  %402 = vmatprep.subr.mxu0 0.0
  %403 = vmatpush1.msra.mxu0 0.0
  %404 = vmatprep.subr.mxu0 0.0
  %405 = vmatpush1.msra.mxu0 0.0
  %406 = vmatprep.subr.mxu0 0.0
  %407 = vmatpush1.msra.mxu0 0.0
  %408 = vmatprep.subr.mxu0 0.0
  %409 = vmatpush1.msra.mxu0 0.0
  %410 = vmatprep.subr.mxu0 0.0
  %411 = vmatpush1.msra.mxu0 0.0
  %412 = vmatprep.subr.mxu0 0.0
  %413 = vmatpush1.msra.mxu0 0.0
  %414 = vmatprep.subr.mxu0 0.0
  %415 = vmatpush1.msra.mxu0 0.0
  %416 = vmatprep.subr.mxu0 0.0
  %417 = vmatpush1.msra.mxu0 0.0
  %418 = vmatprep.subr.mxu0 0.0
  %419 = vmatpush1.msra.mxu0 0.0
  %420 = vmatprep.subr.mxu0 0.0
  %421 = vmatpush1.msra.mxu0 0.0
  %422 = vmatprep.subr.mxu0 0.0
  %423 = vmatpush1.msra.mxu0 0.0
  %424 = vmatprep.subr.mxu0 0.0
  %425 = vmatpush1.msra.mxu0 0.0
  %426 = vmatprep.subr.mxu0 0.0
  %427 = vmatpush1.msra.mxu0 0.0
  %428 = vmatprep.subr.mxu0 0.0
  %429 = vmatpush1.msra.mxu0 0.0
  %430 = vmatprep.subr.mxu0 0.0
  %431 = vmatpush1.msra.mxu0 0.0
  %432 = vmatprep.subr.mxu0 0.0
  %433 = vmatpush1.msra.mxu0 0.0
  %434 = vmatprep.subr.mxu0 0.0
  %435 = vmatpush1.msra.mxu0 0.0
  %436 = vmatprep.subr.mxu0 0.0
  %437 = vmatpush1.msra.mxu0 0.0
  %438 = vmatprep.subr.mxu0 0.0
  %439 = vmatpush1.msra.mxu0 0.0
  %440 = vmatprep.subr.mxu0 0.0
  %441 = vmatpush1.msra.mxu0 0.0
  %442 = vmatprep.subr.mxu0 0.0
  %443 = vmatpush1.msra.mxu0 0.0
  %444 = vmatprep.subr.mxu0 0.0
  %445 = vmatpush1.msra.mxu0 0.0
  %446 = vmatprep.mubr.f32.mxu0 0.0
  %447 = vmatmul.mubr.f32.gmra.mrb[0].mxu0 %v380
  %v448 = vpop.f32.mrb[0].mxu0
  %v449 = vadd.f32 %v375, %v448
  %v450 = vpop.f32.mrb[0].mxu0
  %v451 = vadd.f32 %v377, %v450
  %452 = vdwg.mxu0
  %453 = vrot.lane.b32.xlu0 %v292, 126
  %v454 = vpop.permute.xlu0 %453
  %455 = vrot.lane.b32.xlu0 %v293, 126
  %v456 = vpop.permute.xlu0 %455
  %vm457 = vcmask 1031168
  %v458 = vsel %vm457, %v454, %v456
  %v462 = vsel %vm304, %v29, 0
  %464 = vmatprep.subr.mxu0 %v456
  %465 = vmatpush1.msra.mxu0 %v458
  %466 = vmatprep.subr.mxu0 0.0
  %467 = vmatpush1.msra.mxu0 0.0
  %468 = vmatprep.subr.mxu0 0.0
  %469 = vmatpush1.msra.mxu0 0.0
  %470 = vmatprep.subr.mxu0 0.0
  %471 = vmatpush1.msra.mxu0 0.0
  %472 = vmatprep.subr.mxu0 0.0
  %473 = vmatpush1.msra.mxu0 0.0
  %474 = vmatprep.subr.mxu0 0.0
  %475 = vmatpush1.msra.mxu0 0.0
  %476 = vmatprep.subr.mxu0 0.0
  %477 = vmatpush1.msra.mxu0 0.0
  %478 = vmatprep.subr.mxu0 0.0
  %479 = vmatpush1.msra.mxu0 0.0
  %480 = vmatprep.subr.mxu0 0.0
  %481 = vmatpush1.msra.mxu0 0.0
  %482 = vmatprep.subr.mxu0 0.0
  %483 = vmatpush1.msra.mxu0 0.0
  %484 = vmatprep.subr.mxu0 0.0
  %485 = vmatpush1.msra.mxu0 0.0
  %486 = vmatprep.subr.mxu0 0.0
  %487 = vmatpush1.msra.mxu0 0.0
  %488 = vmatprep.subr.mxu0 0.0
  %489 = vmatpush1.msra.mxu0 0.0
  %490 = vmatprep.subr.mxu0 0.0
  %491 = vmatpush1.msra.mxu0 0.0
  %492 = vmatprep.subr.mxu0 0.0
  %493 = vmatpush1.msra.mxu0 0.0
  %494 = vmatprep.subr.mxu0 0.0
  %495 = vmatpush1.msra.mxu0 0.0
  %496 = vmatprep.subr.mxu0 0.0
  %497 = vmatpush1.msra.mxu0 0.0
  %498 = vmatprep.subr.mxu0 0.0
  %499 = vmatpush1.msra.mxu0 0.0
  %500 = vmatprep.subr.mxu0 0.0
  %501 = vmatpush1.msra.mxu0 0.0
  %502 = vmatprep.subr.mxu0 0.0
  %503 = vmatpush1.msra.mxu0 0.0
  %504 = vmatprep.subr.mxu0 0.0
  %505 = vmatpush1.msra.mxu0 0.0
  %506 = vmatprep.subr.mxu0 0.0
  %507 = vmatpush1.msra.mxu0 0.0
  %508 = vmatprep.subr.mxu0 0.0
  %509 = vmatpush1.msra.mxu0 0.0
  %510 = vmatprep.subr.mxu0 0.0
  %511 = vmatpush1.msra.mxu0 0.0
  %512 = vmatprep.subr.mxu0 0.0
  %513 = vmatpush1.msra.mxu0 0.0
  %514 = vmatprep.subr.mxu0 0.0
  %515 = vmatpush1.msra.mxu0 0.0
  %516 = vmatprep.subr.mxu0 0.0
  %517 = vmatpush1.msra.mxu0 0.0
  %518 = vmatprep.subr.mxu0 0.0
  %519 = vmatpush1.msra.mxu0 0.0
  %520 = vmatprep.subr.mxu0 0.0
  %521 = vmatpush1.msra.mxu0 0.0
  %522 = vmatprep.subr.mxu0 0.0
  %523 = vmatpush1.msra.mxu0 0.0
  %524 = vmatprep.subr.mxu0 0.0
  %525 = vmatpush1.msra.mxu0 0.0
  %526 = vmatprep.subr.mxu0 0.0
  %527 = vmatpush1.msra.mxu0 0.0
  %528 = vmatprep.mubr.f32.mxu0 0.0
  %529 = vmatmul.mubr.f32.gmra.mrb[0].mxu0 %v462
  %v530 = vpop.f32.mrb[0].mxu0
  %v531 = vadd.f32 0.0, %v530
  %v532 = vpop.f32.mrb[0].mxu0
  %v533 = vadd.f32 0.0, %v532
  %534 = vdwg.mxu0
  %v535 = vadd.f32 %v449, %v531
  %v536 = vadd.f32 %v451, %v533
  %538 = vset.pattern.permute.xlu0 0
  %539 = vperm.xlu0 %538, %v31
  %v540 = vpop.permute.xlu0 %539
  %v542 = vadd.f32 %v535, %v540
  %v543 = vadd.f32 %v536, %v540
  %v544 = vmax.f32 %v542, 0.0
  %v545 = vmax.f32 %v543, 0.0
  %547 = vrot.lane.b32.xlu0 %v544, 126
  %v548 = vpop.permute.xlu0 %547
  %550 = vrot.lane.b32.xlu0 %v544, 124
  %v551 = vpop.permute.xlu0 %550
  %553 = vrot.lane.b32.xlu0 %v544, 122
  %v554 = vpop.permute.xlu0 %553
  %556 = vrot.lane.b32.xlu0 %v544, 120
  %v557 = vpop.permute.xlu0 %556
  %559 = vrot.lane.b32.xlu0 %v544, 118
  %v560 = vpop.permute.xlu0 %559
  %562 = vrot.lane.b32.xlu0 %v544, 116
  %v563 = vpop.permute.xlu0 %562
  %565 = vrot.lane.b32.xlu0 %v544, 114
  %v566 = vpop.permute.xlu0 %565
  %569 = vrot.lane.b32.xlu0 %v545, 112
  %v570 = vpop.permute.xlu0 %569
  %572 = vrot.lane.b32.xlu0 %v545, 110
  %v573 = vpop.permute.xlu0 %572
  %575 = vrot.lane.b32.xlu0 %v545, 108
  %v576 = vpop.permute.xlu0 %575
  %578 = vrot.lane.b32.xlu0 %v545, 106
  %v579 = vpop.permute.xlu0 %578
  %581 = vrot.lane.b32.xlu0 %v545, 104
  %v582 = vpop.permute.xlu0 %581
  %584 = vrot.lane.b32.xlu0 %v545, 102
  %v585 = vpop.permute.xlu0 %584
  %vm587 = vcmask 113664
  %v588 = vsel %vm587, %v544, %v548
  %vm589 = vcmask 228352
  %v590 = vsel %vm589, %v588, %v551
  %vm591 = vcmask 343040
  %v592 = vsel %vm591, %v590, %v554
  %vm593 = vcmask 457728
  %v594 = vsel %vm593, %v592, %v557
  %vm595 = vcmask 572416
  %v596 = vsel %vm595, %v594, %v560
  %vm597 = vcmask 687104
  %v598 = vsel %vm597, %v596, %v563
  %vm599 = vcmask 801792
  %v600 = vsel %vm599, %v598, %v566
  %v601 = vsel %vm39, %v600, %v570
  %v602 = vsel %vm457, %v601, %v573
  %vm603 = vcmask 97280
  %v604 = vsel %vm603, %v573, %v576
  %vm605 = vcmask 211968
  %v606 = vsel %vm605, %v604, %v579
  %vm607 = vcmask 326656
  %v608 = vsel %vm607, %v606, %v582
  %vm609 = vcmask 441344
  %v610 = vsel %vm609, %v608, %v585
  %611 = vst [vmem:[%s5] sm:$0xff] %v602
  %vm612 = vcmask 556032
  %613 = vst.msk [vmem:[%s5 + $0x8] sm:$0xff] %vm612, %v610
  %s614 = scalar_lea.vmem %s0, 8
  %v615 = vld [vmem:[%s614] sm:$0xff]
  %v617 = vcombine.high %v615, %v615
  %618 = vrot.lane.b32.xlu0 %v615, 112
  %v619 = vpop.permute.xlu0 %618
  %620 = vrot.lane.b32.xlu0 %v617, 112
  %v621 = vpop.permute.xlu0 %620
  %v622 = vsel %vm39, %v619, %v621
  %v623 = vsel %vm45, %v622, 0
  %v625 = vsel %vm45, %v621, 0
  %627 = vmatprep.subr.mxu0 %v625
  %628 = vmatpush1.msra.mxu0 %v623
  %629 = vmatprep.subr.mxu0 0.0
  %630 = vmatpush1.msra.mxu0 0.0
  %631 = vmatprep.subr.mxu0 0.0
  %632 = vmatpush1.msra.mxu0 0.0
  %633 = vmatprep.subr.mxu0 0.0
  %634 = vmatpush1.msra.mxu0 0.0
  %635 = vmatprep.subr.mxu0 0.0
  %636 = vmatpush1.msra.mxu0 0.0
  %637 = vmatprep.subr.mxu0 0.0
  %638 = vmatpush1.msra.mxu0 0.0
  %639 = vmatprep.subr.mxu0 0.0
  %640 = vmatpush1.msra.mxu0 0.0
  %641 = vmatprep.subr.mxu0 0.0
  %642 = vmatpush1.msra.mxu0 0.0
  %643 = vmatprep.subr.mxu0 0.0
  %644 = vmatpush1.msra.mxu0 0.0
  %645 = vmatprep.subr.mxu0 0.0
  %646 = vmatpush1.msra.mxu0 0.0
  %647 = vmatprep.subr.mxu0 0.0
  %648 = vmatpush1.msra.mxu0 0.0
  %649 = vmatprep.subr.mxu0 0.0
  %650 = vmatpush1.msra.mxu0 0.0
  %651 = vmatprep.subr.mxu0 0.0
  %652 = vmatpush1.msra.mxu0 0.0
  %653 = vmatprep.subr.mxu0 0.0
  %654 = vmatpush1.msra.mxu0 0.0
  %655 = vmatprep.subr.mxu0 0.0
  %656 = vmatpush1.msra.mxu0 0.0
  %657 = vmatprep.subr.mxu0 0.0
  %658 = vmatpush1.msra.mxu0 0.0
  %659 = vmatprep.subr.mxu0 0.0
  %660 = vmatpush1.msra.mxu0 0.0
  %661 = vmatprep.subr.mxu0 0.0
  %662 = vmatpush1.msra.mxu0 0.0
  %663 = vmatprep.subr.mxu0 0.0
  %664 = vmatpush1.msra.mxu0 0.0
  %665 = vmatprep.subr.mxu0 0.0
  %666 = vmatpush1.msra.mxu0 0.0
  %667 = vmatprep.subr.mxu0 0.0
  %668 = vmatpush1.msra.mxu0 0.0
  %669 = vmatprep.subr.mxu0 0.0
  %670 = vmatpush1.msra.mxu0 0.0
  %671 = vmatprep.subr.mxu0 0.0
  %672 = vmatpush1.msra.mxu0 0.0
  %673 = vmatprep.subr.mxu0 0.0
  %674 = vmatpush1.msra.mxu0 0.0
  %675 = vmatprep.subr.mxu0 0.0
  %676 = vmatpush1.msra.mxu0 0.0
  %677 = vmatprep.subr.mxu0 0.0
  %678 = vmatpush1.msra.mxu0 0.0
  %679 = vmatprep.subr.mxu0 0.0
  %680 = vmatpush1.msra.mxu0 0.0
  %681 = vmatprep.subr.mxu0 0.0
  %682 = vmatpush1.msra.mxu0 0.0
  %683 = vmatprep.subr.mxu0 0.0
  %684 = vmatpush1.msra.mxu0 0.0
  %685 = vmatprep.subr.mxu0 0.0
  %686 = vmatpush1.msra.mxu0 0.0
  %687 = vmatprep.subr.mxu0 0.0
  %688 = vmatpush1.msra.mxu0 0.0
  %689 = vmatprep.subr.mxu0 0.0
  %690 = vmatpush1.msra.mxu0 0.0
  %691 = vmatprep.mubr.f32.mxu0 0.0
  %692 = vmatmul.mubr.f32.gmra.mrb[0].mxu0 %v43
  %v693 = vpop.f32.mrb[0].mxu0
  %v694 = vadd.f32 0.0, %v693
  %v695 = vpop.f32.mrb[0].mxu0
  %v696 = vadd.f32 0.0, %v695
  %697 = vdwg.mxu0
  %v698 = vsel %vm45, %v615, 0
  %v700 = vsel %vm45, %v617, 0
  %702 = vmatprep.subr.mxu0 %v700
  %703 = vmatpush1.msra.mxu0 %v698
  %704 = vmatprep.subr.mxu0 0.0
  %705 = vmatpush1.msra.mxu0 0.0
  %706 = vmatprep.subr.mxu0 0.0
  %707 = vmatpush1.msra.mxu0 0.0
  %708 = vmatprep.subr.mxu0 0.0
  %709 = vmatpush1.msra.mxu0 0.0
  %710 = vmatprep.subr.mxu0 0.0
  %711 = vmatpush1.msra.mxu0 0.0
  %712 = vmatprep.subr.mxu0 0.0
  %713 = vmatpush1.msra.mxu0 0.0
  %714 = vmatprep.subr.mxu0 0.0
  %715 = vmatpush1.msra.mxu0 0.0
  %716 = vmatprep.subr.mxu0 0.0
  %717 = vmatpush1.msra.mxu0 0.0
  %718 = vmatprep.subr.mxu0 0.0
  %719 = vmatpush1.msra.mxu0 0.0
  %720 = vmatprep.subr.mxu0 0.0
  %721 = vmatpush1.msra.mxu0 0.0
  %722 = vmatprep.subr.mxu0 0.0
  %723 = vmatpush1.msra.mxu0 0.0
  %724 = vmatprep.subr.mxu0 0.0
  %725 = vmatpush1.msra.mxu0 0.0
  %726 = vmatprep.subr.mxu0 0.0
  %727 = vmatpush1.msra.mxu0 0.0
  %728 = vmatprep.subr.mxu0 0.0
  %729 = vmatpush1.msra.mxu0 0.0
  %730 = vmatprep.subr.mxu0 0.0
  %731 = vmatpush1.msra.mxu0 0.0
  %732 = vmatprep.subr.mxu0 0.0
  %733 = vmatpush1.msra.mxu0 0.0
  %734 = vmatprep.subr.mxu0 0.0
  %735 = vmatpush1.msra.mxu0 0.0
  %736 = vmatprep.subr.mxu0 0.0
  %737 = vmatpush1.msra.mxu0 0.0
  %738 = vmatprep.subr.mxu0 0.0
  %739 = vmatpush1.msra.mxu0 0.0
  %740 = vmatprep.subr.mxu0 0.0
  %741 = vmatpush1.msra.mxu0 0.0
  %742 = vmatprep.subr.mxu0 0.0
  %743 = vmatpush1.msra.mxu0 0.0
  %744 = vmatprep.subr.mxu0 0.0
  %745 = vmatpush1.msra.mxu0 0.0
  %746 = vmatprep.subr.mxu0 0.0
  %747 = vmatpush1.msra.mxu0 0.0
  %748 = vmatprep.subr.mxu0 0.0
  %749 = vmatpush1.msra.mxu0 0.0
  %750 = vmatprep.subr.mxu0 0.0
  %751 = vmatpush1.msra.mxu0 0.0
  %752 = vmatprep.subr.mxu0 0.0
  %753 = vmatpush1.msra.mxu0 0.0
  %754 = vmatprep.subr.mxu0 0.0
  %755 = vmatpush1.msra.mxu0 0.0
  %756 = vmatprep.subr.mxu0 0.0
  %757 = vmatpush1.msra.mxu0 0.0
  %758 = vmatprep.subr.mxu0 0.0
  %759 = vmatpush1.msra.mxu0 0.0
  %760 = vmatprep.subr.mxu0 0.0
  %761 = vmatpush1.msra.mxu0 0.0
  %762 = vmatprep.subr.mxu0 0.0
  %763 = vmatpush1.msra.mxu0 0.0
  %764 = vmatprep.subr.mxu0 0.0
  %765 = vmatpush1.msra.mxu0 0.0
  %766 = vmatprep.mubr.f32.mxu0 0.0
  %767 = vmatmul.mubr.f32.gmra.mrb[0].mxu0 %v122
  %v768 = vpop.f32.mrb[0].mxu0
  %v769 = vadd.f32 %v694, %v768
  %v770 = vpop.f32.mrb[0].mxu0
  %v771 = vadd.f32 %v696, %v770
  %772 = vdwg.mxu0
  %773 = vrot.lane.b32.xlu0 %v615, 96
  %v774 = vpop.permute.xlu0 %773
  %775 = vrot.lane.b32.xlu0 %v617, 96
  %v776 = vpop.permute.xlu0 %775
  %v777 = vsel %vm203, %v774, %v776
  %v778 = vsel %vm45, %v777, 0
  %v780 = vsel %vm45, %v776, 0
  %782 = vmatprep.subr.mxu0 %v780
  %783 = vmatpush1.msra.mxu0 %v778
  %784 = vmatprep.subr.mxu0 0.0
  %785 = vmatpush1.msra.mxu0 0.0
  %786 = vmatprep.subr.mxu0 0.0
  %787 = vmatpush1.msra.mxu0 0.0
  %788 = vmatprep.subr.mxu0 0.0
  %789 = vmatpush1.msra.mxu0 0.0
  %790 = vmatprep.subr.mxu0 0.0
  %791 = vmatpush1.msra.mxu0 0.0
  %792 = vmatprep.subr.mxu0 0.0
  %793 = vmatpush1.msra.mxu0 0.0
  %794 = vmatprep.subr.mxu0 0.0
  %795 = vmatpush1.msra.mxu0 0.0
  %796 = vmatprep.subr.mxu0 0.0
  %797 = vmatpush1.msra.mxu0 0.0
  %798 = vmatprep.subr.mxu0 0.0
  %799 = vmatpush1.msra.mxu0 0.0
  %800 = vmatprep.subr.mxu0 0.0
  %801 = vmatpush1.msra.mxu0 0.0
  %802 = vmatprep.subr.mxu0 0.0
  %803 = vmatpush1.msra.mxu0 0.0
  %804 = vmatprep.subr.mxu0 0.0
  %805 = vmatpush1.msra.mxu0 0.0
  %806 = vmatprep.subr.mxu0 0.0
  %807 = vmatpush1.msra.mxu0 0.0
  %808 = vmatprep.subr.mxu0 0.0
  %809 = vmatpush1.msra.mxu0 0.0
  %810 = vmatprep.subr.mxu0 0.0
  %811 = vmatpush1.msra.mxu0 0.0
  %812 = vmatprep.subr.mxu0 0.0
  %813 = vmatpush1.msra.mxu0 0.0
  %814 = vmatprep.subr.mxu0 0.0
  %815 = vmatpush1.msra.mxu0 0.0
  %816 = vmatprep.subr.mxu0 0.0
  %817 = vmatpush1.msra.mxu0 0.0
  %818 = vmatprep.subr.mxu0 0.0
  %819 = vmatpush1.msra.mxu0 0.0
  %820 = vmatprep.subr.mxu0 0.0
  %821 = vmatpush1.msra.mxu0 0.0
  %822 = vmatprep.subr.mxu0 0.0
  %823 = vmatpush1.msra.mxu0 0.0
  %824 = vmatprep.subr.mxu0 0.0
  %825 = vmatpush1.msra.mxu0 0.0
  %826 = vmatprep.subr.mxu0 0.0
  %827 = vmatpush1.msra.mxu0 0.0
  %828 = vmatprep.subr.mxu0 0.0
  %829 = vmatpush1.msra.mxu0 0.0
  %830 = vmatprep.subr.mxu0 0.0
  %831 = vmatpush1.msra.mxu0 0.0
  %832 = vmatprep.subr.mxu0 0.0
  %833 = vmatpush1.msra.mxu0 0.0
  %834 = vmatprep.subr.mxu0 0.0
  %835 = vmatpush1.msra.mxu0 0.0
  %836 = vmatprep.subr.mxu0 0.0
  %837 = vmatpush1.msra.mxu0 0.0
  %838 = vmatprep.subr.mxu0 0.0
  %839 = vmatpush1.msra.mxu0 0.0
  %840 = vmatprep.subr.mxu0 0.0
  %841 = vmatpush1.msra.mxu0 0.0
  %842 = vmatprep.subr.mxu0 0.0
  %843 = vmatpush1.msra.mxu0 0.0
  %844 = vmatprep.subr.mxu0 0.0
  %845 = vmatpush1.msra.mxu0 0.0
  %846 = vmatprep.mubr.f32.mxu0 0.0
  %847 = vmatmul.mubr.f32.gmra.mrb[0].mxu0 %v206
  %v848 = vpop.f32.mrb[0].mxu0
  %v849 = vadd.f32 0.0, %v848
  %v850 = vpop.f32.mrb[0].mxu0
  %v851 = vadd.f32 0.0, %v850
  %852 = vdwg.mxu0
  %v853 = vadd.f32 %v769, %v849
  %v854 = vadd.f32 %v771, %v851
  %v855 = vadd.f32 %v853, %v288
  %v856 = vadd.f32 %v854, %v288
  %v857 = vmax.f32 %v855, 0.0
  %v858 = vmax.f32 %v856, 0.0
  %861 = vrot.lane.b32.xlu0 %v857, 127
  %v862 = vpop.permute.xlu0 %861
  %863 = vrot.lane.b32.xlu0 %v858, 127
  %v864 = vpop.permute.xlu0 %863
  %v865 = vsel %vm300, %v862, %v864
  %868 = vmatprep.subr.mxu0 %v864
  %869 = vmatpush1.msra.mxu0 %v865
  %870 = vmatprep.subr.mxu0 0.0
  %871 = vmatpush1.msra.mxu0 0.0
  %872 = vmatprep.subr.mxu0 0.0
  %873 = vmatpush1.msra.mxu0 0.0
  %874 = vmatprep.subr.mxu0 0.0
  %875 = vmatpush1.msra.mxu0 0.0
  %876 = vmatprep.subr.mxu0 0.0
  %877 = vmatpush1.msra.mxu0 0.0
  %878 = vmatprep.subr.mxu0 0.0
  %879 = vmatpush1.msra.mxu0 0.0
  %880 = vmatprep.subr.mxu0 0.0
  %881 = vmatpush1.msra.mxu0 0.0
  %882 = vmatprep.subr.mxu0 0.0
  %883 = vmatpush1.msra.mxu0 0.0
  %884 = vmatprep.subr.mxu0 0.0
  %885 = vmatpush1.msra.mxu0 0.0
  %886 = vmatprep.subr.mxu0 0.0
  %887 = vmatpush1.msra.mxu0 0.0
  %888 = vmatprep.subr.mxu0 0.0
  %889 = vmatpush1.msra.mxu0 0.0
  %890 = vmatprep.subr.mxu0 0.0
  %891 = vmatpush1.msra.mxu0 0.0
  %892 = vmatprep.subr.mxu0 0.0
  %893 = vmatpush1.msra.mxu0 0.0
  %894 = vmatprep.subr.mxu0 0.0
  %895 = vmatpush1.msra.mxu0 0.0
  %896 = vmatprep.subr.mxu0 0.0
  %897 = vmatpush1.msra.mxu0 0.0
  %898 = vmatprep.subr.mxu0 0.0
  %899 = vmatpush1.msra.mxu0 0.0
  %900 = vmatprep.subr.mxu0 0.0
  %901 = vmatpush1.msra.mxu0 0.0
  %902 = vmatprep.subr.mxu0 0.0
  %903 = vmatpush1.msra.mxu0 0.0
  %904 = vmatprep.subr.mxu0 0.0
  %905 = vmatpush1.msra.mxu0 0.0
  %906 = vmatprep.subr.mxu0 0.0
  %907 = vmatpush1.msra.mxu0 0.0
  %908 = vmatprep.subr.mxu0 0.0
  %909 = vmatpush1.msra.mxu0 0.0
  %910 = vmatprep.subr.mxu0 0.0
  %911 = vmatpush1.msra.mxu0 0.0
  %912 = vmatprep.subr.mxu0 0.0
  %913 = vmatpush1.msra.mxu0 0.0
  %914 = vmatprep.subr.mxu0 0.0
  %915 = vmatpush1.msra.mxu0 0.0
  %916 = vmatprep.subr.mxu0 0.0
  %917 = vmatpush1.msra.mxu0 0.0
  %918 = vmatprep.subr.mxu0 0.0
  %919 = vmatpush1.msra.mxu0 0.0
  %920 = vmatprep.subr.mxu0 0.0
  %921 = vmatpush1.msra.mxu0 0.0
  %922 = vmatprep.subr.mxu0 0.0
  %923 = vmatpush1.msra.mxu0 0.0
  %924 = vmatprep.subr.mxu0 0.0
  %925 = vmatpush1.msra.mxu0 0.0
  %926 = vmatprep.subr.mxu0 0.0
  %927 = vmatpush1.msra.mxu0 0.0
  %928 = vmatprep.subr.mxu0 0.0
  %929 = vmatpush1.msra.mxu0 0.0
  %930 = vmatprep.subr.mxu0 0.0
  %931 = vmatpush1.msra.mxu0 0.0
  %932 = vmatprep.mubr.f32.mxu0 0.0
  %933 = vmatmul.mubr.f32.gmra.mrb[0].mxu0 %v306
  %v934 = vpop.f32.mrb[0].mxu0
  %v935 = vadd.f32 0.0, %v934
  %v936 = vpop.f32.mrb[0].mxu0
  %v937 = vadd.f32 0.0, %v936
  %938 = vdwg.mxu0
  %939 = vmatprep.subr.mxu0 %v858
  %940 = vmatpush1.msra.mxu0 %v857
  %941 = vmatprep.subr.mxu0 0.0
  %942 = vmatpush1.msra.mxu0 0.0
  %943 = vmatprep.subr.mxu0 0.0
  %944 = vmatpush1.msra.mxu0 0.0
  %945 = vmatprep.subr.mxu0 0.0
  %946 = vmatpush1.msra.mxu0 0.0
  %947 = vmatprep.subr.mxu0 0.0
  %948 = vmatpush1.msra.mxu0 0.0
  %949 = vmatprep.subr.mxu0 0.0
  %950 = vmatpush1.msra.mxu0 0.0
  %951 = vmatprep.subr.mxu0 0.0
  %952 = vmatpush1.msra.mxu0 0.0
  %953 = vmatprep.subr.mxu0 0.0
  %954 = vmatpush1.msra.mxu0 0.0
  %955 = vmatprep.subr.mxu0 0.0
  %956 = vmatpush1.msra.mxu0 0.0
  %957 = vmatprep.subr.mxu0 0.0
  %958 = vmatpush1.msra.mxu0 0.0
  %959 = vmatprep.subr.mxu0 0.0
  %960 = vmatpush1.msra.mxu0 0.0
  %961 = vmatprep.subr.mxu0 0.0
  %962 = vmatpush1.msra.mxu0 0.0
  %963 = vmatprep.subr.mxu0 0.0
  %964 = vmatpush1.msra.mxu0 0.0
  %965 = vmatprep.subr.mxu0 0.0
  %966 = vmatpush1.msra.mxu0 0.0
  %967 = vmatprep.subr.mxu0 0.0
  %968 = vmatpush1.msra.mxu0 0.0
  %969 = vmatprep.subr.mxu0 0.0
  %970 = vmatpush1.msra.mxu0 0.0
  %971 = vmatprep.subr.mxu0 0.0
  %972 = vmatpush1.msra.mxu0 0.0
  %973 = vmatprep.subr.mxu0 0.0
  %974 = vmatpush1.msra.mxu0 0.0
  %975 = vmatprep.subr.mxu0 0.0
  %976 = vmatpush1.msra.mxu0 0.0
  %977 = vmatprep.subr.mxu0 0.0
  %978 = vmatpush1.msra.mxu0 0.0
  %979 = vmatprep.subr.mxu0 0.0
  %980 = vmatpush1.msra.mxu0 0.0
  %981 = vmatprep.subr.mxu0 0.0
  %982 = vmatpush1.msra.mxu0 0.0
  %983 = vmatprep.subr.mxu0 0.0
  %984 = vmatpush1.msra.mxu0 0.0
  %985 = vmatprep.subr.mxu0 0.0
  %986 = vmatpush1.msra.mxu0 0.0
  %987 = vmatprep.subr.mxu0 0.0
  %988 = vmatpush1.msra.mxu0 0.0
  %989 = vmatprep.subr.mxu0 0.0
  %990 = vmatpush1.msra.mxu0 0.0
  %991 = vmatprep.subr.mxu0 0.0
  %992 = vmatpush1.msra.mxu0 0.0
  %993 = vmatprep.subr.mxu0 0.0
  %994 = vmatpush1.msra.mxu0 0.0
  %995 = vmatprep.subr.mxu0 0.0
  %996 = vmatpush1.msra.mxu0 0.0
  %997 = vmatprep.subr.mxu0 0.0
  %998 = vmatpush1.msra.mxu0 0.0
  %999 = vmatprep.subr.mxu0 0.0
  %1000 = vmatpush1.msra.mxu0 0.0
  %1001 = vmatprep.subr.mxu0 0.0
  %1002 = vmatpush1.msra.mxu0 0.0
  %1003 = vmatprep.mubr.f32.mxu0 0.0
  %1004 = vmatmul.mubr.f32.gmra.mrb[0].mxu0 %v380
  %v1005 = vpop.f32.mrb[0].mxu0
  %v1006 = vadd.f32 %v935, %v1005
  %v1007 = vpop.f32.mrb[0].mxu0
  %v1008 = vadd.f32 %v937, %v1007
  %1009 = vdwg.mxu0
  %1010 = vrot.lane.b32.xlu0 %v857, 126
  %v1011 = vpop.permute.xlu0 %1010
  %1012 = vrot.lane.b32.xlu0 %v858, 126
  %v1013 = vpop.permute.xlu0 %1012
  %v1014 = vsel %vm457, %v1011, %v1013
  %1017 = vmatprep.subr.mxu0 %v1013
  %1018 = vmatpush1.msra.mxu0 %v1014
  %1019 = vmatprep.subr.mxu0 0.0
  %1020 = vmatpush1.msra.mxu0 0.0
  %1021 = vmatprep.subr.mxu0 0.0
  %1022 = vmatpush1.msra.mxu0 0.0
  %1023 = vmatprep.subr.mxu0 0.0
  %1024 = vmatpush1.msra.mxu0 0.0
  %1025 = vmatprep.subr.mxu0 0.0
  %1026 = vmatpush1.msra.mxu0 0.0
  %1027 = vmatprep.subr.mxu0 0.0
  %1028 = vmatpush1.msra.mxu0 0.0
  %1029 = vmatprep.subr.mxu0 0.0
  %1030 = vmatpush1.msra.mxu0 0.0
  %1031 = vmatprep.subr.mxu0 0.0
  %1032 = vmatpush1.msra.mxu0 0.0
  %1033 = vmatprep.subr.mxu0 0.0
  %1034 = vmatpush1.msra.mxu0 0.0
  %1035 = vmatprep.subr.mxu0 0.0
  %1036 = vmatpush1.msra.mxu0 0.0
  %1037 = vmatprep.subr.mxu0 0.0
  %1038 = vmatpush1.msra.mxu0 0.0
  %1039 = vmatprep.subr.mxu0 0.0
  %1040 = vmatpush1.msra.mxu0 0.0
  %1041 = vmatprep.subr.mxu0 0.0
  %1042 = vmatpush1.msra.mxu0 0.0
  %1043 = vmatprep.subr.mxu0 0.0
  %1044 = vmatpush1.msra.mxu0 0.0
  %1045 = vmatprep.subr.mxu0 0.0
  %1046 = vmatpush1.msra.mxu0 0.0
  %1047 = vmatprep.subr.mxu0 0.0
  %1048 = vmatpush1.msra.mxu0 0.0
  %1049 = vmatprep.subr.mxu0 0.0
  %1050 = vmatpush1.msra.mxu0 0.0
  %1051 = vmatprep.subr.mxu0 0.0
  %1052 = vmatpush1.msra.mxu0 0.0
  %1053 = vmatprep.subr.mxu0 0.0
  %1054 = vmatpush1.msra.mxu0 0.0
  %1055 = vmatprep.subr.mxu0 0.0
  %1056 = vmatpush1.msra.mxu0 0.0
  %1057 = vmatprep.subr.mxu0 0.0
  %1058 = vmatpush1.msra.mxu0 0.0
  %1059 = vmatprep.subr.mxu0 0.0
  %1060 = vmatpush1.msra.mxu0 0.0
  %1061 = vmatprep.subr.mxu0 0.0
  %1062 = vmatpush1.msra.mxu0 0.0
  %1063 = vmatprep.subr.mxu0 0.0
  %1064 = vmatpush1.msra.mxu0 0.0
  %1065 = vmatprep.subr.mxu0 0.0
  %1066 = vmatpush1.msra.mxu0 0.0
  %1067 = vmatprep.subr.mxu0 0.0
  %1068 = vmatpush1.msra.mxu0 0.0
  %1069 = vmatprep.subr.mxu0 0.0
  %1070 = vmatpush1.msra.mxu0 0.0
  %1071 = vmatprep.subr.mxu0 0.0
  %1072 = vmatpush1.msra.mxu0 0.0
  %1073 = vmatprep.subr.mxu0 0.0
  %1074 = vmatpush1.msra.mxu0 0.0
  %1075 = vmatprep.subr.mxu0 0.0
  %1076 = vmatpush1.msra.mxu0 0.0
  %1077 = vmatprep.subr.mxu0 0.0
  %1078 = vmatpush1.msra.mxu0 0.0
  %1079 = vmatprep.subr.mxu0 0.0
  %1080 = vmatpush1.msra.mxu0 0.0
  %1081 = vmatprep.mubr.f32.mxu0 0.0
  %1082 = vmatmul.mubr.f32.gmra.mrb[0].mxu0 %v462
  %v1083 = vpop.f32.mrb[0].mxu0
  %v1084 = vadd.f32 0.0, %v1083
  %v1085 = vpop.f32.mrb[0].mxu0
  %v1086 = vadd.f32 0.0, %v1085
  %1087 = vdwg.mxu0
  %v1088 = vadd.f32 %v1006, %v1084
  %v1089 = vadd.f32 %v1008, %v1086
  %v1090 = vadd.f32 %v1088, %v540
  %v1091 = vadd.f32 %v1089, %v540
  %v1092 = vmax.f32 %v1090, 0.0
  %v1093 = vmax.f32 %v1091, 0.0
  %1095 = vrot.lane.b32.xlu0 %v1092, 126
  %v1096 = vpop.permute.xlu0 %1095
  %1098 = vrot.lane.b32.xlu0 %v1092, 124
  %v1099 = vpop.permute.xlu0 %1098
  %1101 = vrot.lane.b32.xlu0 %v1092, 122
  %v1102 = vpop.permute.xlu0 %1101
  %1104 = vrot.lane.b32.xlu0 %v1092, 120
  %v1105 = vpop.permute.xlu0 %1104
  %1107 = vrot.lane.b32.xlu0 %v1092, 118
  %v1108 = vpop.permute.xlu0 %1107
  %1110 = vrot.lane.b32.xlu0 %v1092, 116
  %v1111 = vpop.permute.xlu0 %1110
  %1113 = vrot.lane.b32.xlu0 %v1092, 114
  %v1114 = vpop.permute.xlu0 %1113
  %1117 = vrot.lane.b32.xlu0 %v1093, 112
  %v1118 = vpop.permute.xlu0 %1117
  %1120 = vrot.lane.b32.xlu0 %v1093, 110
  %v1121 = vpop.permute.xlu0 %1120
  %1123 = vrot.lane.b32.xlu0 %v1093, 108
  %v1124 = vpop.permute.xlu0 %1123
  %1126 = vrot.lane.b32.xlu0 %v1093, 106
  %v1127 = vpop.permute.xlu0 %1126
  %1129 = vrot.lane.b32.xlu0 %v1093, 104
  %v1130 = vpop.permute.xlu0 %1129
  %1132 = vrot.lane.b32.xlu0 %v1093, 102
  %v1133 = vpop.permute.xlu0 %1132
  %v1135 = vsel %vm587, %v1092, %v1096
  %v1136 = vsel %vm589, %v1135, %v1099
  %v1137 = vsel %vm591, %v1136, %v1102
  %v1138 = vsel %vm593, %v1137, %v1105
  %v1139 = vsel %vm595, %v1138, %v1108
  %v1140 = vsel %vm597, %v1139, %v1111
  %v1141 = vsel %vm599, %v1140, %v1114
  %v1142 = vsel %vm39, %v1141, %v1118
  %v1143 = vsel %vm457, %v1142, %v1121
  %v1144 = vsel %vm603, %v1121, %v1124
  %v1145 = vsel %vm605, %v1144, %v1127
  %v1146 = vsel %vm607, %v1145, %v1130
  %v1147 = vsel %vm609, %v1146, %v1133
  %s1148 = scalar_lea.vmem %s5, 16
  %1149 = vst [vmem:[%s1148] sm:$0xff] %v1143
  %1150 = vst.msk [vmem:[%s1148 + $0x8] sm:$0xff] %vm612, %v1147
  // Predicated region
  $region22: #{aux_conv_forward.1} parent=0 // pred_check
    _
  $region23: #{aux_conv_forward.1} parent=0 // pred_check_branch
    %1152 = sbr.rel (0) target = $region25
  $region24: #{aux_conv_forward.1} parent=0 // pred_region
    _
  $region25: #{aux_conv_forward.1} parent=0 // pred_fallthru
    _
  // Predicated region
  $region26: #{aux_conv_forward.1} parent=0 // pred_check
    _
  $region27: #{aux_conv_forward.1} parent=0 // pred_check_branch
    %1154 = sbr.rel (0) target = $region29
  $region28: #{aux_conv_forward.1} parent=0 // pred_region
    _
  $region29: #{aux_conv_forward.1} parent=0 // pred_fallthru
    _

</llo_original>
